<compile_context>
chip_gen: v7x
topology: tpu7x:2x2x1
jax: 0.10.0
libtpu: 0.0.40
codegen_flags: <defaults>
</compile_context>

<pallas_src>
import functools
import math

import jax
import jax.numpy as jnp
from jax.experimental import pallas as pl
from jax.experimental.pallas import tpu as pltpu

_LN2 = math.log(2.0)

MAX_ROWS_REDUCE = 512          # 2 MiB f32 per input block (good for v7x HBM)
MAX_ROWS_NONE = 256            # 3-operand elementwise path fits v5e scoped VMEM
_LANE_WIDTHS = (1024, 512, 256, 128)
_VMEM_LIMIT = 32 * 1024 * 1024


# ----------------------------------------------------------------------------
# Kernels
# ----------------------------------------------------------------------------
def _bce(x, t):
    # clamp(x, min=0) - x*t + log(1 + exp(-|x|))   (numerically stable form)
    return jnp.maximum(x, 0.0) - x * t + jnp.log1p(jnp.exp(-jnp.abs(x)))


def _bce_reduce_kernel(x_ref, t_ref, out_ref, acc_ref, *, tm, group):
    """Grid = (n_splits [parallel], steps [arbitrary]).

    acc_ref: (8, C) f32 VMEM accumulator when `group` (tm % 8 == 0), else
             (tm, C).  Only VPU adds per step; one XLU reduce at the end.
    out_ref: (1, 1) SMEM partial sum for the current split.
    """
    g = pl.program_id(1)

    @pl.when(g == 0)
    def _():
        acc_ref[...] = jnp.zeros_like(acc_ref)

    if group:
        # Tree-add the block 8 rows at a time into the small accumulator:
        # pure VPU work, never materializes a full (tm, C) f32 temporary.
        part = None
        for r in range(tm // 8):
            sl = pl.ds(r * 8, 8)
            xr = x_ref[sl, :].astype(jnp.float32)
            tr = t_ref[sl, :].astype(jnp.float32)
            l = _bce(xr, tr)
            part = l if part is None else part + l
        acc_ref[...] += part
    else:
        x = x_ref[...].astype(jnp.float32)
        t = t_ref[...].astype(jnp.float32)
        acc_ref[...] += _bce(x, t)

    @pl.when(g == pl.num_programs(1) - 1)
    def _():
        # Single cross-lane/sublane reduce per split.
        out_ref[0, 0] = jnp.sum(acc_ref[...])


def _bce_elementwise_kernel(x_ref, t_ref, o_ref):
    """reduction='none': per-element loss, lane-dense output tile."""
    x = x_ref[...].astype(jnp.float32)
    t = t_ref[...].astype(jnp.float32)
    o_ref[...] = _bce(x, t)


# ----------------------------------------------------------------------------
# Layout selection (wrapper-side, all static Python)
# ----------------------------------------------------------------------------
def _exact_layout(n, max_rows):
    """Find (tm, C, num_blocks) with n == num_blocks*tm*C and C % 128 == 0.

    Returns None if no zero-copy lane-dense factorization exists.
    """
    for c in _LANE_WIDTHS:
        if n % c:
            continue
        rows = n // c
        if rows <= max_rows:
            return rows, c, 1          # single block == full array dims
        for tm in range(max_rows, 7, -8):   # tm must be a multiple of 8
            if rows % tm == 0:
                return tm, c, rows // tm
    return None


def _padded_layout(n, max_rows, wide=1024):
    """Fallback layout requiring zero padding up to num_blocks*tm*wide."""
    rows = max(-(-n // wide), 1)
    if rows <= max_rows:
        return rows, wide, 1
    tm = max_rows
    return tm, wide, -(-rows // tm)


# ----------------------------------------------------------------------------
# Wrappers
# ----------------------------------------------------------------------------
def _reduce_loss_sum(logits, targets, n):
    """Global f32 sum of the per-element BCE loss over the n real elements."""
    layout = _exact_layout(n, MAX_ROWS_REDUCE)
    pad = 0
    if layout is None:
        layout = _padded_layout(n, MAX_ROWS_REDUCE)
        tm, c, num_blocks = layout
        pad = num_blocks * tm * c - n
    tm, c, num_blocks = layout

    x = logits.reshape(-1)
    t = targets.reshape(-1)
    if pad:
        # Zero padding: each padded (x=0, t=0) element contributes exactly
        # ln(2); corrected below -- no in-kernel masking needed.
        x = jnp.pad(x, (0, pad))
        t = jnp.pad(t, (0, pad))
    rows = num_blocks * tm
    x2d = x.reshape(rows, c)
    t2d = t.reshape(rows, c)

    # Leading parallel axis of 2 lets v7x shard the reduce across both TCs
    # (harmless / serial on v5e & v6e).
    n_splits = 2 if (num_blocks >= 2 and num_blocks % 2 == 0) else 1
    inner = num_blocks // n_splits

    group = (tm % 8 == 0)
    acc_shape = (8, c) if group else (tm, c)

    kernel = functools.partial(_bce_reduce_kernel, tm=tm, group=group)

    cost = pl.CostEstimate(
        flops=8 * n,
        transcendentals=2 * n,
        bytes_accessed=int(x2d.size) * x2d.dtype.itemsize
        + int(t2d.size) * t2d.dtype.itemsize + n_splits * 4,
    )

    partials = pl.pallas_call(
        kernel,
        out_shape=jax.ShapeDtypeStruct((n_splits, 1), jnp.float32),
        grid_spec=pltpu.PrefetchScalarGridSpec(
            num_scalar_prefetch=0,
            grid=(n_splits, inner),
            in_specs=[
                pl.BlockSpec((tm, c), lambda s, g: (s * inner + g, 0)),
                pl.BlockSpec((tm, c), lambda s, g: (s * inner + g, 0)),
            ],
            out_specs=pl.BlockSpec((1, 1), lambda s, g: (s, 0),
                                   memory_space=pltpu.SMEM),
            scratch_shapes=[pltpu.VMEM(acc_shape, jnp.float32)],
        ),
        compiler_params=pltpu.CompilerParams(
            dimension_semantics=("parallel", "arbitrary"),
            vmem_limit_bytes=_VMEM_LIMIT),
        cost_estimate=cost,
    )(x2d, t2d)

    total = jnp.sum(partials)
    if pad:
        total = total - jnp.float32(pad * _LN2)
    return total


def _elementwise_loss(logits, targets, n, orig_shape):
    """reduction='none' path: per-element loss with the original shape."""
    layout = _exact_layout(n, MAX_ROWS_NONE)
    pad = 0
    if layout is None:
        layout = _padded_layout(n, MAX_ROWS_NONE)
        tm, c, num_blocks = layout
        pad = num_blocks * tm * c - n
    tm, c, num_blocks = layout

    x = logits.reshape(-1)
    t = targets.reshape(-1)
    if pad:
        x = jnp.pad(x, (0, pad))
        t = jnp.pad(t, (0, pad))
    rows = num_blocks * tm
    x2d = x.reshape(rows, c)
    t2d = t.reshape(rows, c)

    cost = pl.CostEstimate(
        flops=8 * n,
        transcendentals=2 * n,
        bytes_accessed=int(x2d.size) * x2d.dtype.itemsize
        + int(t2d.size) * t2d.dtype.itemsize + rows * c * 4,
    )

    out2d = pl.pallas_call(
        _bce_elementwise_kernel,
        out_shape=jax.ShapeDtypeStruct((rows, c), jnp.float32),
        grid_spec=pltpu.PrefetchScalarGridSpec(
            num_scalar_prefetch=0,
            grid=(num_blocks,),
            in_specs=[
                pl.BlockSpec((tm, c), lambda i: (i, 0)),
                pl.BlockSpec((tm, c), lambda i: (i, 0)),
            ],
            out_specs=pl.BlockSpec((tm, c), lambda i: (i, 0)),
        ),
        compiler_params=pltpu.CompilerParams(
            dimension_semantics=("parallel",),
            vmem_limit_bytes=_VMEM_LIMIT),
        cost_estimate=cost,
    )(x2d, t2d)

    if pad:
        return out2d.reshape(-1)[:n].reshape(orig_shape)
    return out2d.reshape(orig_shape)


def custom_bce_with_logits_loss(logits, targets, reduction="mean"):
    """JAX/Pallas equivalent of CustomBCEWithLogitsLoss.forward."""
    if reduction not in ("mean", "sum", "none"):
        raise ValueError("Reduction must be one of: 'mean', 'sum', or 'none'")

    # PyTorch does targets.float().  Integer/bool {0,1} targets are exact in
    # the logits dtype, which halves target HBM traffic for bf16 logits; the
    # in-kernel math is always f32.  Genuinely soft float labels keep their
    # own floating dtype.
    if not jnp.issubdtype(targets.dtype, jnp.floating):
        if jnp.issubdtype(logits.dtype, jnp.floating):
            targets = targets.astype(logits.dtype)
        else:
            targets = targets.astype(jnp.float32)

    orig_shape = logits.shape
    n = 1
    for d in orig_shape:
        n *= int(d)

    if n == 0:
        if reduction == "none":
            return jnp.zeros(orig_shape, jnp.float32)
        if reduction == "sum":
            return jnp.float32(0.0)
        return jnp.float32(jnp.nan)

    if reduction == "none":
        return _elementwise_loss(logits, targets, n, orig_shape)

    total = _reduce_loss_sum(logits, targets, n)
    if reduction == "mean":
        return total / jnp.float32(n)
    return total


# ----------------------------------------------------------------------------
# Reference (pure JAX) for sanity checking
# ----------------------------------------------------------------------------
def _ref_loss(logits, targets, reduction="mean"):
    x = logits.astype(jnp.float32)
    t = targets.astype(jnp.float32)
    loss = jnp.maximum(x, 0.0) - x * t + jnp.log1p(jnp.exp(-jnp.abs(x)))
    if reduction == "mean":
        return loss.mean()
    if reduction == "sum":
        return loss.sum()
    return loss


if __name__ == "__main__":
    key = jax.random.PRNGKey(0)
    k1, k2, k3, k4, k5, k6 = jax.random.split(key, 6)

    # Small UNet-style NCHW logits/targets.
    logits = jax.random.normal(k1, (2, 4, 16, 16), dtype=jnp.float32)
    targets = (jax.random.uniform(k2, (2, 4, 16, 16)) > 0.5).astype(jnp.float32)

    out_mean = jax.block_until_ready(
        custom_bce_with_logits_loss(logits, targets, reduction="mean"))
    ref_mean = _ref_loss(logits, targets, "mean")
    assert jnp.allclose(out_mean, ref_mean, atol=1e-5, rtol=1e-5), (out_mean, ref_mean)

    out_sum = jax.block_until_ready(
        custom_bce_with_logits_loss(logits, targets, reduction="sum"))
    ref_sum = _ref_loss(logits, targets, "sum")
    assert jnp.allclose(out_sum, ref_sum, atol=1e-3, rtol=1e-5), (out_sum, ref_sum)

    out_none = jax.block_until_ready(
        custom_bce_with_logits_loss(logits, targets, reduction="none"))
    assert out_none.shape == logits.shape
    assert jnp.allclose(out_none, _ref_loss(logits, targets, "none"),
                        atol=1e-5, rtol=1e-5)

    # bf16 logits with integer {0,1} targets: targets ride along in bf16.
    logits_bf = logits.astype(jnp.bfloat16)
    targets_i = (jax.random.uniform(k3, (2, 4, 16, 16)) > 0.5).astype(jnp.int32)
    out_bf = jax.block_until_ready(
        custom_bce_with_logits_loss(logits_bf, targets_i, reduction="mean"))
    ref_bf = _ref_loss(logits_bf.astype(jnp.float32),
                       targets_i.astype(jnp.float32), "mean")
    assert jnp.allclose(out_bf, ref_bf, atol=1e-3, rtol=1e-3), (out_bf, ref_bf)

    # Odd element count -> zero-pad fallback + ln(2) correction (no in-kernel mask).
    odd_logits = jax.random.normal(k4, (1, 1, 65, 65), dtype=jnp.float32)
    odd_targets = (jax.random.uniform(k5, (1, 1, 65, 65)) > 0.5).astype(jnp.float32)
    o_mean = jax.block_until_ready(
        custom_bce_with_logits_loss(odd_logits, odd_targets, reduction="mean"))
    assert jnp.allclose(o_mean, _ref_loss(odd_logits, odd_targets, "mean"),
                        atol=1e-5, rtol=1e-4), o_mean
    o_sum = jax.block_until_ready(
        custom_bce_with_logits_loss(odd_logits, odd_targets, reduction="sum"))
    assert jnp.allclose(o_sum, _ref_loss(odd_logits, odd_targets, "sum"),
                        atol=1e-2, rtol=1e-4), o_sum
    o_none = jax.block_until_ready(
        custom_bce_with_logits_loss(odd_logits, odd_targets, reduction="none"))
    assert o_none.shape == odd_logits.shape
    assert jnp.allclose(o_none, _ref_loss(odd_logits, odd_targets, "none"),
                        atol=1e-5, rtol=1e-5)

    # Multi-block case: exercises zero-copy layout, 2-way split and the
    # multi-step (8, C) accumulator path (grid = (2, 2)).
    big_logits = jax.random.normal(k6, (1, 2, 1024, 1024), dtype=jnp.float32)
    big_targets = (big_logits > 0.0).astype(jnp.float32)
    b_mean = jax.block_until_ready(
        custom_bce_with_logits_loss(big_logits, big_targets, reduction="mean"))
    ref_b_mean = _ref_loss(big_logits, big_targets, "mean")
    assert jnp.allclose(b_mean, ref_b_mean, atol=1e-4, rtol=1e-4), (b_mean, ref_b_mean)

    print("KERNEL_OK")
</pallas_src>

<mosaic_0001>
module attributes {stable_mosaic.version = 11 : i64} {
  func.func @_bce_reduce_kernel(%arg0: i32, %arg1: i32, %arg2: memref<2x1024xf32, #tpu.memory_space<vmem>>, %arg3: memref<2x1024xf32, #tpu.memory_space<vmem>>, %arg4: memref<1x1xf32, #tpu.memory_space<smem>>, %arg5: memref<2x1024xf32, #tpu.memory_space<vmem>>) attributes {dimension_semantics = [#tpu.dimension_semantics<parallel>, #tpu.dimension_semantics<arbitrary>], iteration_bounds = array<i64: 1, 1>, scalar_prefetch = 0 : i64, scratch_operands = 1 : i64, tpu.core_type = #tpu.core_type<tc>, window_params = [{transform_indices = @transform_0, window_bounds = array<i64: 2, 1024>}, {transform_indices = @transform_1, window_bounds = array<i64: 2, 1024>}, {transform_indices = @transform_2, window_bounds = array<i64: 1, 1>}]} {
    %c0_i32 = arith.constant 0 : i32
    %0 = arith.cmpi eq, %arg1, %c0_i32 : i32
    %1 = arith.extui %0 : i1 to i32
    %c0_i32_0 = arith.constant 0 : i32
    %2 = arith.cmpi ne, %1, %c0_i32_0 : i32
    scf.if %2 {
      %cst_11 = arith.constant 0.000000e+00 : f32
      %21 = vector.broadcast %cst_11 : f32 to vector<2x1024xf32>
      %c0_12 = arith.constant 0 : index
      %c0_13 = arith.constant 0 : index
      %22 = vector.load %arg5[%c0_12, %c0_13] : memref<2x1024xf32, #tpu.memory_space<vmem>>, vector<2x1024xf32>
      tpu.vector_store %arg5[%c0_12, %c0_13], %21 {strides = array<i32>} : memref<2x1024xf32, #tpu.memory_space<vmem>>, vector<2x1024xf32>,
    } else {
    }
    %c0 = arith.constant 0 : index
    %c0_1 = arith.constant 0 : index
    %3 = vector.load %arg2[%c0, %c0_1] : memref<2x1024xf32, #tpu.memory_space<vmem>>, vector<2x1024xf32>
    %c0_2 = arith.constant 0 : index
    %c0_3 = arith.constant 0 : index
    %4 = vector.load %arg3[%c0_2, %c0_3] : memref<2x1024xf32, #tpu.memory_space<vmem>>, vector<2x1024xf32>
    %c0_4 = arith.constant 0 : index
    %c0_5 = arith.constant 0 : index
    %5 = vector.load %arg5[%c0_4, %c0_5] : memref<2x1024xf32, #tpu.memory_space<vmem>>, vector<2x1024xf32>
    %cst = arith.constant 0.000000e+00 : f32
    %6 = vector.broadcast %cst : f32 to vector<2x1024xf32>
    %7 = arith.maximumf %3, %6 : vector<2x1024xf32>
    %8 = arith.mulf %3, %4 : vector<2x1024xf32>
    %9 = arith.subf %7, %8 : vector<2x1024xf32>
    %10 = math.absf %3 : vector<2x1024xf32>
    %cst_6 = arith.constant 0.000000e+00 : f32
    %11 = vector.broadcast %cst_6 : f32 to vector<2x1024xf32>
    %12 = arith.subf %11, %10 : vector<2x1024xf32>
    %13 = math.exp %12 : vector<2x1024xf32>
    %14 = math.log1p %13 : vector<2x1024xf32>
    %15 = arith.addf %9, %14 : vector<2x1024xf32>
    %16 = arith.addf %5, %15 : vector<2x1024xf32>
    %c0_7 = arith.constant 0 : index
    %c0_8 = arith.constant 0 : index
    %17 = vector.load %arg5[%c0_7, %c0_8] : memref<2x1024xf32, #tpu.memory_space<vmem>>, vector<2x1024xf32>
    tpu.vector_store %arg5[%c0_7, %c0_8], %16 {strides = array<i32>} : memref<2x1024xf32, #tpu.memory_space<vmem>>, vector<2x1024xf32>,
    %c0_i32_9 = arith.constant 0 : i32
    %18 = arith.cmpi eq, %arg1, %c0_i32_9 : i32
    %19 = arith.extui %18 : i1 to i32
    %c0_i32_10 = arith.constant 0 : i32
    %20 = arith.cmpi ne, %19, %c0_i32_10 : i32
    scf.if %20 {
      %c0_11 = arith.constant 0 : index
      %c0_12 = arith.constant 0 : index
      %21 = vector.load %arg5[%c0_11, %c0_12] : memref<2x1024xf32, #tpu.memory_space<vmem>>, vector<2x1024xf32>
      %22 = vector.shape_cast %21 : vector<2x1024xf32> to vector<1x2x1024xf32>
      %cst_13 = arith.constant dense<0.000000e+00> : vector<1xf32>
      %23 = vector.multi_reduction <add>, %22, %cst_13 [1, 2] : vector<1x2x1024xf32> to vector<1xf32>
      %24 = vector.shape_cast %23 : vector<1xf32> to vector<1x1x1xf32>
      %25 = vector.extract %24[0, 0, 0] : f32 from vector<1x1x1xf32>
      %c0_14 = arith.constant 0 : index
      %c0_15 = arith.constant 0 : index
      %26 = memref.load %arg4[%c0_14, %c0_15] : memref<1x1xf32, #tpu.memory_space<smem>>
      memref.store %25, %arg4[%c0_14, %c0_15] : memref<1x1xf32, #tpu.memory_space<smem>>
    } else {
    }
    return
  }
  func.func @transform_0(%arg0: i32, %arg1: i32) -> (i32, i32) {
    %c1_i32 = arith.constant 1 : i32
    %0 = arith.muli %arg0, %c1_i32 : i32
    %1 = arith.addi %0, %arg1 : i32
    %c0_i32 = arith.constant 0 : i32
    %c0_i32_0 = arith.constant 0 : i32
    return %1, %c0_i32 : i32, i32
  }
  func.func @transform_1(%arg0: i32, %arg1: i32) -> (i32, i32) {
    %c1_i32 = arith.constant 1 : i32
    %0 = arith.muli %arg0, %c1_i32 : i32
    %1 = arith.addi %0, %arg1 : i32
    %c0_i32 = arith.constant 0 : i32
    %c0_i32_0 = arith.constant 0 : i32
    return %1, %c0_i32 : i32, i32
  }
  func.func @transform_2(%arg0: i32, %arg1: i32) -> (i32, i32) {
    %c0_i32 = arith.constant 0 : i32
    %c0_i32_0 = arith.constant 0 : i32
    return %arg0, %c0_i32 : i32, i32
  }
}

</mosaic_0001>

<llo_original>
// kernel: tpu_custom_call.1
$region0: #{tpu_custom_call.1}
  #allocation0 [shape = 'u32[]', space=smem, size = 0x4, offset = 0x4, fixed_abs, tag = 'smem constant byte address 0x4 - core index']
  #allocation1 [shape = 'u32[144,128]{1,0:T(1,128)}', space=vmem, size = 0x12000, scoped, tag = 'internal scratch']
  #allocation2 [shape = 'f32[2,1024]{1,0:T(2,128)}', space=vmem, size = 0x2000, scoped, tag = 'scratch operand']
  %s0 = inlined_call_operand.hbm [shape: f32[2,1024], index: 0, kind: input, shape index: {}]
  %s1 = inlined_call_operand.hbm [shape: f32[2,1024], index: 1, kind: input, shape index: {}]
  %s2 = inlined_call_operand.hbm [shape: f32[1,1], index: 2, kind: output, shape index: {}]
  %s3 = sld [smem:[#allocation0]]
  $region34: #{tpu_custom_call.1} parent=0
    _
  %s5 = ssub.s32 1, %s3
  %s6 = scalar_select 0, %s5, %s3
  $region1: #{tpu_custom_call.1} parent=0
    #allocation3 [shape = 'u8[8192]{0}', space=vmem, size = 0x2000, scoped, tag = 'input window, operand 0, single buffered']
    #allocation4 [shape = 's32[1]{0}', space=sflag, size = 0x4, scoped, tag = 'scoped memory for tpu_custom_call.1']
    #allocation5 [shape = 's32[1]{0}', space=sflag, size = 0x4, scoped, tag = 'scoped memory for tpu_custom_call.1']
    #allocation6 [shape = 'u8[8192]{0}', space=vmem, size = 0x2000, scoped, tag = 'input window, operand 1, single buffered']
    #allocation7 [shape = 's32[1]{0}', space=sflag, size = 0x4, scoped, tag = 'scoped memory for tpu_custom_call.1']
    #allocation8 [shape = 'u8[512]{0}', space=smem, size = 0x200, scoped, tag = 'output window, operand 0, single buffered']
    %7 = vsyncpa [#allocation4], 0
    %8 = vsyncpa [#allocation7], 0
    %9 = vsyncpa [#allocation5], 0
    // Predicated region
    $region2: #{tpu_custom_call.1} parent=1 // pred_check
      _
    $region3: #{tpu_custom_call.1} parent=1 // pred_check_branch
      %11 = sbr.rel (0) target = $region5
    $region4: #{tpu_custom_call.1} parent=1 // pred_region
      %s12 = sadd.s32 0, 0
      %s14 = ssub.s32 256, 256
      %15 = vsyncadd [#allocation4], %s14
      %s16 = smul.addr %s12, 8
      %s17 = smul.addr %s16, 32
      %s18 = scalar_lea.hbm %s0, %s17
      %s20 = sshll.u32 [#allocation3], 4
      %s21 = int_to_ptr.vmem [resolvable:$true] %s20
      %23 = dma.hbm_to_vmem [thread:$0]  %s18, 256, %s21, [#allocation4]
    $region5: #{tpu_custom_call.1} parent=1 // pred_fallthru
      _
    // Predicated region
    $region6: #{tpu_custom_call.1} parent=1 // pred_check
      _
    $region7: #{tpu_custom_call.1} parent=1 // pred_check_branch
      %25 = sbr.rel (0) target = $region9
    $region8: #{tpu_custom_call.1} parent=1 // pred_region
      %s26 = sadd.s32 0, 0
      %s28 = ssub.s32 256, 256
      %29 = vsyncadd [#allocation7], %s28
      %s30 = smul.addr %s26, 8
      %s31 = smul.addr %s30, 32
      %s32 = scalar_lea.hbm %s1, %s31
      %s34 = sshll.u32 [#allocation6], 4
      %s35 = int_to_ptr.vmem [resolvable:$true] %s34
      %37 = dma.hbm_to_vmem [thread:$0]  %s32, 256, %s35, [#allocation7]
    $region9: #{tpu_custom_call.1} parent=1 // pred_fallthru
      _
    // Predicated region
    $region10: #{tpu_custom_call.1} parent=1 // pred_check
      _
    $region11: #{tpu_custom_call.1} parent=1 // pred_check_branch
      %39 = sbr.rel (0) target = $region13
    $region12: #{tpu_custom_call.1} parent=1 // pred_region
      %40 = dma.done [#allocation4], 256
    $region13: #{tpu_custom_call.1} parent=1 // pred_fallthru
      _
    // Predicated region
    $region14: #{tpu_custom_call.1} parent=1 // pred_check
      _
    $region15: #{tpu_custom_call.1} parent=1 // pred_check_branch
      %42 = sbr.rel (0) target = $region17
    $region16: #{tpu_custom_call.1} parent=1 // pred_region
      %43 = dma.done [#allocation7], 256
    $region17: #{tpu_custom_call.1} parent=1 // pred_fallthru
      _
    %s44 = sadd.s32 0, 0
    %s45 = sadd.s32 0, 0
    %p46 = scmp.eq.s32.totalorder 0, 0
    // Predicated region
    $region18: #{tpu_custom_call.1} parent=1 // pred_check
      %p47 = pneg %p46
    $region19: #{tpu_custom_call.1} parent=1 // pred_check_branch
      %49 = sbr.rel (%p47) target = $region21
    $region20: #{tpu_custom_call.1} parent=1 // pred_region
      %50 = vst [vmem:[#allocation2] sm:$0xff] 0.0
      %51 = vst [vmem:[#allocation2 + $0x8] sm:$0xff] 0.0
    $region21: #{tpu_custom_call.1} parent=1 // pred_fallthru
      _
    %v52 = vld [vmem:[#allocation3] sm:$0xff]
    %v53 = vld [vmem:[#allocation3 + $0x8] sm:$0xff]
    %v54 = vld [vmem:[#allocation6] sm:$0xff]
    %v55 = vld [vmem:[#allocation6 + $0x8] sm:$0xff]
    %v56 = vld [vmem:[#allocation2] sm:$0xff]
    %v57 = vld [vmem:[#allocation2 + $0x8] sm:$0xff]
    %v58 = vmax.f32 %v52, 0.0
    %v59 = vmax.f32 %v53, 0.0
    %v60 = vmul.f32 %v52, %v54
    %v61 = vmul.f32 %v53, %v55
    %v62 = vsub.f32 %v58, %v60
    %v63 = vsub.f32 %v59, %v61
    %v64 = vand.u32 2147483647, %v52
    %v65 = vand.u32 2147483647, %v53
    %v66 = vsub.f32 0.0, %v64
    %v67 = vsub.f32 0.0, %v65
    %v68 = vmul.f32 %v66, 1.442695
    %v69 = vpow.pop %v68
    %v70 = vmul.f32 %v67, 1.442695
    %v71 = vpow.pop %v70
    %v72 = vadd.f32 %v69, 1.0
    %v73 = vlog2.pop %v72
    %v74 = vmul.f32 %v73, 0.6931472
    %v75 = vmul.f32 -0.5, %v69
    %v76 = vadd.f32 %v75, 1.0
    %v77 = vmul.f32 %v76, %v69
    %v78 = vand.u32 2147483647, %v69
    %vm79 = vcmp.lt.f32.partialorder %v78, 0.0004427343
    %v80 = vsel %vm79, %v77, %v74
    %v81 = vadd.f32 %v71, 1.0
    %v82 = vlog2.pop %v81
    %v83 = vmul.f32 %v82, 0.6931472
    %v84 = vmul.f32 -0.5, %v71
    %v85 = vadd.f32 %v84, 1.0
    %v86 = vmul.f32 %v85, %v71
    %v87 = vand.u32 2147483647, %v71
    %vm88 = vcmp.lt.f32.partialorder %v87, 0.0004427343
    %v89 = vsel %vm88, %v86, %v83
    %v90 = vadd.f32 %v62, %v80
    %v91 = vadd.f32 %v63, %v89
    %v92 = vadd.f32 %v56, %v90
    %v93 = vadd.f32 %v57, %v91
    %94 = vst [vmem:[#allocation2] sm:$0xff] %v92
    %95 = vst [vmem:[#allocation2 + $0x8] sm:$0xff] %v93
    // Predicated region
    $region22: #{tpu_custom_call.1} parent=1 // pred_check
      %p96 = pneg %p46
    $region23: #{tpu_custom_call.1} parent=1 // pred_check_branch
      %98 = sbr.rel (%p96) target = $region25
    $region24: #{tpu_custom_call.1} parent=1 // pred_region
      %v99 = vld [vmem:[#allocation2] sm:$0xff]
      %v100 = vld [vmem:[#allocation2 + $0x8] sm:$0xff]
      %v103 = vcombine.high %v99, %v99
      %v105 = vunpack.c.l.s4 1983009808
      %v106 = vunpack.c.0.s8 %v105
      %v107 = vlaneseq
      %v108 = vshrl.u32 %v107, 7
      %v109 = vsub.s32 %v106, %v108
      %v110 = vrot.slane %v99, %v109
      %v112 = vunpack.c.l.s4 1983009808
      %v113 = vunpack.c.0.s8 %v112
      %v114 = vlaneseq
      %v115 = vshrl.u32 %v114, 7
      %v116 = vsub.s32 %v113, %v115
      %v117 = vrot.slane %v103, %v116
      %v118 = vcombine.high %v110, %v110
      %v119 = vcombine.high %v117, %v117
      %v120 = vcombine.high %v100, %v100
      %v122 = vunpack.c.l.s4 1983009808
      %v123 = vunpack.c.0.s8 %v122
      %v124 = vlaneseq
      %v125 = vshrl.u32 %v124, 7
      %v126 = vsub.s32 %v123, %v125
      %v127 = vrot.slane %v100, %v126
      %v129 = vunpack.c.l.s4 1983009808
      %v130 = vunpack.c.0.s8 %v129
      %v131 = vlaneseq
      %v132 = vshrl.u32 %v131, 7
      %v133 = vsub.s32 %v130, %v132
      %v134 = vrot.slane %v120, %v133
      %v135 = vcombine.high %v127, %v127
      %v136 = vcombine.high %v134, %v134
      %vm145 = vcmask 1041408
      %v146 = vsel %vm145, %v110, 0.0
      %v147 = vsel %vm145, %v118, 0.0
      %v148 = vadd.f32 %v146, %v147
      %v149 = vsel %vm145, %v117, 0.0
      %v150 = vadd.f32 %v148, %v149
      %v151 = vsel %vm145, %v119, 0.0
      %v152 = vadd.f32 %v150, %v151
      %v153 = vsel %vm145, %v127, 0.0
      %v154 = vadd.f32 %v152, %v153
      %v155 = vsel %vm145, %v135, 0.0
      %v156 = vadd.f32 %v154, %v155
      %v157 = vsel %vm145, %v134, 0.0
      %v158 = vadd.f32 %v156, %v157
      %v159 = vsel %vm145, %v136, 0.0
      %v160 = vadd.f32 %v158, %v159
      %161 = vadd.xlane.f32.xlu0 %v160
      %v162 = vpop.xlane.xlu0 %161
      %v163 = vrot.slane %v162, 4
      %v164 = vadd.f32 %v162, %v163
      %v165 = vrot.slane %v164, 2
      %v166 = vadd.f32 %v164, %v165
      %v167 = vrot.slane %v166, 1
      %v168 = vadd.f32 %v166, %v167
      %s169 = vtos %v168
      %s170 = scalar_lea.smem [#allocation8], 0
      %171 = sst [smem:[%s170]] %s169
    $region25: #{tpu_custom_call.1} parent=1 // pred_fallthru
      _
    // Predicated region
    $region26: #{tpu_custom_call.1} parent=1 // pred_check
      _
    $region27: #{tpu_custom_call.1} parent=1 // pred_check_branch
      %173 = sbr.rel (0) target = $region29
    $region28: #{tpu_custom_call.1} parent=1 // pred_region
      %s175 = ssub.s32 16, 16
      %176 = vsyncadd [#allocation5], %s175
      %179 = dma.smem_to_hbm [#allocation8], 16, %s2, [#allocation5]
    $region29: #{tpu_custom_call.1} parent=1 // pred_fallthru
      _
    // Predicated region
    $region30: #{tpu_custom_call.1} parent=1 // pred_check
      _
    $region31: #{tpu_custom_call.1} parent=1 // pred_check_branch
      %181 = sbr.rel (0) target = $region33
    $region32: #{tpu_custom_call.1} parent=1 // pred_region
      %182 = dma.done [#allocation5], 16
    $region33: #{tpu_custom_call.1} parent=1 // pred_fallthru
      _
    %183 = sfence
    %184 = vsyncpa [#allocation4], 1
    %185 = vsyncpa [#allocation7], 1
    %186 = vsyncpa [#allocation5], 1

</llo_original>
